<compile_context>
chip_gen: v7x
topology: tpu7x:2x2x1
jax: 0.10.0
libtpu: 0.0.40
codegen_flags: <defaults>
</compile_context>

<pallas_src>
import functools

import jax
import jax.numpy as jnp
from jax import lax
from jax.experimental import pallas as pl
from jax.experimental.pallas import tpu as pltpu


# ----------------------------------------------------------------------------
# Fused Pallas kernel
# ----------------------------------------------------------------------------
def _sdl_kernel(x_ref, sigma_prev_ref, nf_ref, loss_ref, sigma_new_ref, *,
                alpha, eps, training):
    x = x_ref[...].astype(jnp.float32)
    m, n = x.shape

    # ---- BatchNorm1d(affine=False), training-mode batch statistics ---------
    mean = jnp.mean(x, axis=0, keepdims=True)
    centered = x - mean
    var = jnp.mean(centered * centered, axis=0, keepdims=True)   # biased var
    x_hat = centered * lax.rsqrt(var + eps)                      # EUP rsqrt

    # ---- covariance EMA -----------------------------------------------------
    # gram = x_hat^T @ x_hat : contract the batch (sublane) axis on the MXU.
    gram = lax.dot_general(
        x_hat, x_hat, (((0,), (0,)), ((), ())),
        preferred_element_type=jnp.float32)
    new_sigma = gram * (1.0 / (m - 1))
    sigma = alpha * sigma_prev_ref[...] + new_sigma
    sigma_new_ref[...] = sigma.astype(sigma_new_ref.dtype)

    if training:
        norm_factor = alpha * nf_ref[0] + 1.0
    else:
        norm_factor = nf_ref[0]

    # ---- off-diagonal absolute-covariance penalty ---------------------------
    abs_sigma = jnp.abs(sigma)
    rows = lax.broadcasted_iota(jnp.int32, (n, n), 0)
    cols = lax.broadcasted_iota(jnp.int32, (n, n), 1)
    off_diag = jnp.where(rows == cols, 0.0, abs_sigma)   # sum(.) == sum - trace
    # scalar-level division: |sigma/nf| summed == sum|sigma| * |1/nf|
    loss = jnp.sum(off_diag) * jnp.abs(1.0 / norm_factor) * (1.0 / (n * n - n))

    loss_ref[0, 0] = loss


@functools.partial(jax.jit, static_argnames=("alpha", "training"))
def _sdl_forward(inputs, sigma_prev, norm_factor, *, alpha, training):
    m, n = inputs.shape
    nf = jnp.reshape(norm_factor.astype(jnp.float32), (1,))
    loss, sigma_new = pl.pallas_call(
        functools.partial(_sdl_kernel, alpha=float(alpha), eps=1e-5,
                          training=training),
        in_specs=[
            pl.BlockSpec(memory_space=pltpu.MemorySpace.VMEM),   # inputs [m, n]
            pl.BlockSpec(memory_space=pltpu.MemorySpace.VMEM),   # sigma buffer
            pl.BlockSpec(memory_space=pltpu.MemorySpace.SMEM),   # norm_factor
        ],
        out_specs=(
            pl.BlockSpec(memory_space=pltpu.MemorySpace.SMEM),   # scalar loss
            pl.BlockSpec(memory_space=pltpu.MemorySpace.VMEM),   # updated sigma
        ),
        out_shape=(
            jax.ShapeDtypeStruct((1, 1), jnp.float32),
            jax.ShapeDtypeStruct((n, n), jnp.float32),
        ),
    )(inputs.astype(jnp.float32), sigma_prev.astype(jnp.float32), nf)

    loss_vec = jnp.full((m,), loss[0, 0], jnp.float32)     # loss.expand(m)
    if training:
        new_norm_factor = alpha * norm_factor + 1.0
        return loss_vec, sigma_new, new_norm_factor
    return loss_vec, sigma_prev, norm_factor


# ----------------------------------------------------------------------------
# Module wrapper (state held on the object, threaded functionally)
# ----------------------------------------------------------------------------
class StochasticDecorrelationLoss:
    """JAX/Pallas port of the torch StochasticDecorrelationLoss module."""

    def __init__(self, dimension, alpha):
        self.dimension = int(dimension)
        self.alpha = float(alpha)
        self.sigma = jnp.zeros((dimension, dimension), jnp.float32)
        self.norm_factor = jnp.zeros((), jnp.float32)
        self.training = True
        # TODO(synk): BatchNorm1d running_mean/running_var tracking (a torch
        # training-mode side effect that does not affect the returned loss)
        # is not maintained; eval-mode normalization with running stats is
        # therefore not implemented.

    def __call__(self, inputs):
        loss_vec, sigma_new, nf_new = _sdl_forward(
            inputs, self.sigma, self.norm_factor,
            alpha=self.alpha, training=self.training)
        if self.training:
            self.sigma = sigma_new
            self.norm_factor = nf_new
        return loss_vec


# ----------------------------------------------------------------------------
# Pure-JAX reference (sanity check in __main__)
# ----------------------------------------------------------------------------
def _reference_forward(inputs, sigma_prev, norm_factor, alpha, eps=1e-5):
    m, n = inputs.shape
    mean = jnp.mean(inputs, axis=0, keepdims=True)
    var = jnp.mean((inputs - mean) ** 2, axis=0, keepdims=True)
    x_hat = (inputs - mean) / jnp.sqrt(var + eps)
    new_sigma = jnp.matmul(x_hat.T, x_hat,
                           precision=lax.Precision.HIGHEST) / (m - 1)
    sigma = alpha * sigma_prev + new_sigma
    nf = alpha * norm_factor + 1.0
    abs_sigma = jnp.abs(sigma / nf)
    loss = (jnp.sum(abs_sigma) - jnp.trace(abs_sigma)) / (n * n - n)
    return jnp.full((m,), loss), sigma, nf


# ----------------------------------------------------------------------------
# Main
# ----------------------------------------------------------------------------
if __name__ == "__main__":
    key = jax.random.PRNGKey(0)
    k1, k2 = jax.random.split(key)

    batch, dim = 64, 128        # features on the lane axis (128 -> lane-dense)
    alpha = 0.9

    x1 = jax.random.normal(k1, (batch, dim), jnp.float32)
    x2 = 0.5 * jax.random.normal(k2, (batch, dim), jnp.float32) + 0.25

    module = StochasticDecorrelationLoss(dimension=dim, alpha=alpha)

    ref_sigma = jnp.zeros((dim, dim), jnp.float32)
    ref_nf = jnp.zeros((), jnp.float32)

    ok = True
    for x in (x1, x2):          # two steps exercise the EMA buffer update
        loss_vec = module(x)
        jax.block_until_ready(loss_vec)
        jax.block_until_ready(module.sigma)

        ref_loss, ref_sigma, ref_nf = _reference_forward(
            x, ref_sigma, ref_nf, alpha)

        ok &= loss_vec.shape == (batch,)
        ok &= module.sigma.shape == (dim, dim)
        ok &= bool(jnp.all(jnp.isfinite(loss_vec)))
        ok &= bool(jnp.allclose(loss_vec, ref_loss, rtol=1e-2, atol=1e-3))
        ok &= bool(jnp.allclose(module.sigma, ref_sigma, rtol=1e-2, atol=1e-3))

    assert ok, "Pallas kernel mismatch vs pure-JAX reference"
    print("KERNEL_OK")
</pallas_src>

<mosaic_0001>
module attributes {stable_mosaic.version = 11 : i64} {
  func.func @_sdl_kernel(%arg0: memref<64x128xf32, #tpu.memory_space<vmem>>, %arg1: memref<128x128xf32, #tpu.memory_space<vmem>>, %arg2: memref<1xf32, #tpu.memory_space<smem>>, %arg3: memref<1x1xf32, #tpu.memory_space<smem>>, %arg4: memref<128x128xf32, #tpu.memory_space<vmem>>) attributes {dimension_semantics = [], scalar_prefetch = 0 : i64, scratch_operands = 0 : i64, tpu.core_type = #tpu.core_type<tc>} {
    %c0 = arith.constant 0 : index
    %c0_0 = arith.constant 0 : index
    %0 = vector.load %arg0[%c0, %c0_0] : memref<64x128xf32, #tpu.memory_space<vmem>>, vector<64x128xf32>
    %cst = arith.constant dense<0.000000e+00> : vector<128xf32>
    %1 = vector.multi_reduction <add>, %0, %cst [0] : vector<64x128xf32> to vector<128xf32>
    %2 = vector.shape_cast %1 : vector<128xf32> to vector<1x128xf32>
    %cst_1 = arith.constant 6.400000e+01 : f32
    %3 = vector.broadcast %cst_1 : f32 to vector<1x128xf32>
    %4 = arith.divf %2, %3 : vector<1x128xf32>
    %5 = vector.broadcast %4 : vector<1x128xf32> to vector<64x128xf32>
    %6 = arith.subf %0, %5 : vector<64x128xf32>
    %7 = arith.mulf %6, %6 : vector<64x128xf32>
    %cst_2 = arith.constant dense<0.000000e+00> : vector<128xf32>
    %8 = vector.multi_reduction <add>, %7, %cst_2 [0] : vector<64x128xf32> to vector<128xf32>
    %9 = vector.shape_cast %8 : vector<128xf32> to vector<1x128xf32>
    %cst_3 = arith.constant 6.400000e+01 : f32
    %10 = vector.broadcast %cst_3 : f32 to vector<1x128xf32>
    %11 = arith.divf %9, %10 : vector<1x128xf32>
    %cst_4 = arith.constant 9.99999974E-6 : f32
    %12 = vector.broadcast %cst_4 : f32 to vector<1x128xf32>
    %13 = arith.addf %11, %12 : vector<1x128xf32>
    %14 = math.rsqrt %13 : vector<1x128xf32>
    %15 = vector.broadcast %14 : vector<1x128xf32> to vector<64x128xf32>
    %16 = arith.mulf %6, %15 : vector<64x128xf32>
    %cst_5 = arith.constant dense<0.000000e+00> : vector<128x128xf32>
    %17 = tpu.matmul %16, %16, %cst_5 {dimension_numbers = #tpu.dot_dimension_numbers<[0], [0], [1], [1], [0, 1, 1, 1], [], []>} : vector<64x128xf32>, vector<64x128xf32>, vector<128x128xf32> -> vector<128x128xf32>
    %cst_6 = arith.constant 0.0158730168 : f32
    %18 = vector.broadcast %cst_6 : f32 to vector<128x128xf32>
    %19 = arith.mulf %17, %18 : vector<128x128xf32>
    %c0_7 = arith.constant 0 : index
    %c0_8 = arith.constant 0 : index
    %20 = vector.load %arg1[%c0_7, %c0_8] : memref<128x128xf32, #tpu.memory_space<vmem>>, vector<128x128xf32>
    %cst_9 = arith.constant 0.899999976 : f32
    %21 = vector.broadcast %cst_9 : f32 to vector<128x128xf32>
    %22 = arith.mulf %21, %20 : vector<128x128xf32>
    %23 = arith.addf %22, %19 : vector<128x128xf32>
    %c0_10 = arith.constant 0 : index
    %c0_11 = arith.constant 0 : index
    %24 = vector.load %arg4[%c0_10, %c0_11] : memref<128x128xf32, #tpu.memory_space<vmem>>, vector<128x128xf32>
    tpu.vector_store %arg4[%c0_10, %c0_11], %23 {strides = array<i32>} : memref<128x128xf32, #tpu.memory_space<vmem>>, vector<128x128xf32>,
    %c0_12 = arith.constant 0 : index
    %25 = memref.load %arg2[%c0_12] : memref<1xf32, #tpu.memory_space<smem>>
    %cst_13 = arith.constant 0.899999976 : f32
    %26 = arith.mulf %cst_13, %25 : f32
    %cst_14 = arith.constant 1.000000e+00 : f32
    %27 = arith.addf %26, %cst_14 : f32
    %28 = math.absf %23 : vector<128x128xf32>
    %29 = tpu.iota {dimensions = array<i32: 0>} : vector<128x128xi32>
    %30 = tpu.iota {dimensions = array<i32: 1>} : vector<128x128xi32>
    %31 = arith.cmpi eq, %29, %30 : vector<128x128xi32>
    %cst_15 = arith.constant 0.000000e+00 : f32
    %32 = vector.broadcast %cst_15 : f32 to vector<128x128xf32>
    %33 = arith.select %31, %32, %28 : vector<128x128xi1>, vector<128x128xf32>
    %34 = vector.shape_cast %33 : vector<128x128xf32> to vector<1x128x128xf32>
    %cst_16 = arith.constant dense<0.000000e+00> : vector<1xf32>
    %35 = vector.multi_reduction <add>, %34, %cst_16 [1, 2] : vector<1x128x128xf32> to vector<1xf32>
    %36 = vector.shape_cast %35 : vector<1xf32> to vector<1x1x1xf32>
    %37 = vector.extract %36[0, 0, 0] : f32 from vector<1x1x1xf32>
    %cst_17 = arith.constant 1.000000e+00 : f32
    %38 = arith.divf %cst_17, %27 : f32
    %39 = math.absf %38 : f32
    %40 = arith.mulf %37, %39 : f32
    %cst_18 = arith.constant 6.15157478E-5 : f32
    %41 = arith.mulf %40, %cst_18 : f32
    %c0_19 = arith.constant 0 : index
    %c0_20 = arith.constant 0 : index
    %42 = memref.load %arg3[%c0_19, %c0_20] : memref<1x1xf32, #tpu.memory_space<smem>>
    memref.store %41, %arg3[%c0_19, %c0_20] : memref<1x1xf32, #tpu.memory_space<smem>>
    return
  }
}

</mosaic_0001>

<llo_original>
// kernel: _sdl_forward.1
$region0: #{_sdl_forward.1}
  #allocation0 [shape = 'u32[]', space=smem, size = 0x4, offset = 0x4, fixed_abs, tag = 'smem constant byte address 0x4 - core index']
  #allocation1 [shape = 'u32[144,128]{1,0:T(1,128)}', space=vmem, size = 0x12000, scoped, tag = 'internal scratch']
  #allocation2 [shape = 'f32[1]{0:T(128)S(6)}', space=smem, size = 0x200, scoped, tag = 'scoped memory for _sdl_forward.1']
  %s0 = inlined_call_operand.hbm [shape: f32[64,128], index: 0, kind: input, shape index: {}]
  %s1 = inlined_call_operand.hbm [shape: f32[128,128], index: 1, kind: input, shape index: {}]
  %s2 = inlined_call_operand.<no memory space> [shape: f32[1], index: 2, kind: input, shape index: {}]
  %s3 = inlined_call_operand.hbm [shape: f32[1,1], index: 3, kind: output, shape index: {0}]
  %s4 = inlined_call_operand.hbm [shape: f32[128,128], index: 4, kind: output, shape index: {1}]
  %5 = xla_tuple %s3, %s4
  %s6 = sld [smem:[#allocation0]]
  $region38: #{_sdl_forward.1} parent=0
    _
  %s8 = ssub.s32 1, %s6
  %s9 = scalar_select 0, %s8, %s6
  %10 = sst [smem:[#allocation2]] %s2
  $region1: #{_sdl_forward.1} parent=0
    #allocation3 [shape = 'u8[32768]{0}', space=vmem, size = 0x8000, scoped, tag = 'input window, operand 0, single buffered']
    #allocation4 [shape = 's32[1]{0}', space=sflag, size = 0x4, scoped, tag = 'scoped memory for _sdl_forward.1']
    #allocation5 [shape = 's32[1]{0}', space=sflag, size = 0x4, scoped, tag = 'scoped memory for _sdl_forward.1']
    #allocation6 [shape = 's32[1]{0}', space=sflag, size = 0x4, scoped, tag = 'scoped memory for _sdl_forward.1']
    #allocation7 [shape = 'u8[65536]{0}', space=vmem, size = 0x10000, scoped, tag = 'input window, operand 1, single buffered']
    #allocation8 [shape = 's32[1]{0}', space=sflag, size = 0x4, scoped, tag = 'scoped memory for _sdl_forward.1']
    #allocation9 [shape = 'u8[512]{0}', space=smem, size = 0x200, scoped, tag = 'output window, operand 0, single buffered']
    #allocation10 [shape = 'u8[65536]{0}', space=vmem, size = 0x10000, scoped, tag = 'output window, operand 1, single buffered']
    %11 = vsyncpa [#allocation4], 0
    %12 = vsyncpa [#allocation8], 0
    %13 = vsyncpa [#allocation6], 0
    %14 = vsyncpa [#allocation5], 0
    // Predicated region
    $region2: #{_sdl_forward.1} parent=1 // pred_check
      _
    $region3: #{_sdl_forward.1} parent=1 // pred_check_branch
      %16 = sbr.rel (0) target = $region5
    $region4: #{_sdl_forward.1} parent=1 // pred_region
      %s18 = ssub.s32 1024, 1024
      %19 = vsyncadd [#allocation4], %s18
      %s20 = sshll.u32 [#allocation3], 4
      %s21 = int_to_ptr.vmem [resolvable:$true] %s20
      %26 = dma.hbm_to_vmem [thread:$0]  %s0, 1024, %s21, [#allocation4], 128, 128, 8
    $region5: #{_sdl_forward.1} parent=1 // pred_fallthru
      _
    // Predicated region
    $region6: #{_sdl_forward.1} parent=1 // pred_check
      _
    $region7: #{_sdl_forward.1} parent=1 // pred_check_branch
      %28 = sbr.rel (0) target = $region9
    $region8: #{_sdl_forward.1} parent=1 // pred_region
      %s30 = ssub.s32 2048, 2048
      %31 = vsyncadd [#allocation8], %s30
      %s32 = sshll.u32 [#allocation7], 4
      %s33 = int_to_ptr.vmem [resolvable:$true] %s32
      %38 = dma.hbm_to_vmem [thread:$0]  %s1, 2048, %s33, [#allocation8], 128, 128, 8
    $region9: #{_sdl_forward.1} parent=1 // pred_fallthru
      _
    // Predicated region
    $region10: #{_sdl_forward.1} parent=1 // pred_check
      _
    $region11: #{_sdl_forward.1} parent=1 // pred_check_branch
      %40 = sbr.rel (0) target = $region13
    $region12: #{_sdl_forward.1} parent=1 // pred_region
      _
    $region13: #{_sdl_forward.1} parent=1 // pred_fallthru
      _
    // Predicated region
    $region14: #{_sdl_forward.1} parent=1 // pred_check
      _
    $region15: #{_sdl_forward.1} parent=1 // pred_check_branch
      %42 = sbr.rel (0) target = $region17
    $region16: #{_sdl_forward.1} parent=1 // pred_region
      %43 = dma.done [#allocation4], 1024
    $region17: #{_sdl_forward.1} parent=1 // pred_fallthru
      _
    // Predicated region
    $region18: #{_sdl_forward.1} parent=1 // pred_check
      _
    $region19: #{_sdl_forward.1} parent=1 // pred_check_branch
      %45 = sbr.rel (0) target = $region21
    $region20: #{_sdl_forward.1} parent=1 // pred_region
      %46 = dma.done [#allocation8], 2048
    $region21: #{_sdl_forward.1} parent=1 // pred_fallthru
      _
    %v47 = vld [vmem:[#allocation3] sm:$0xff]
    %v48 = vld [vmem:[#allocation3 + $0x8] sm:$0xff]
    %v49 = vld [vmem:[#allocation3 + $0x10] sm:$0xff]
    %v50 = vld [vmem:[#allocation3 + $0x18] sm:$0xff]
    %v51 = vld [vmem:[#allocation3 + $0x20] sm:$0xff]
    %v52 = vld [vmem:[#allocation3 + $0x28] sm:$0xff]
    %v53 = vld [vmem:[#allocation3 + $0x30] sm:$0xff]
    %v54 = vld [vmem:[#allocation3 + $0x38] sm:$0xff]
    %v55 = vadd.f32 %v47, %v48
    %v56 = vadd.f32 %v55, %v49
    %v57 = vadd.f32 %v56, %v50
    %v58 = vadd.f32 %v57, %v51
    %v59 = vadd.f32 %v58, %v52
    %v60 = vadd.f32 %v59, %v53
    %v61 = vadd.f32 %v60, %v54
    %v62 = vrot.slane %v61, 4
    %v63 = vadd.f32 %v61, %v62
    %v64 = vrot.slane %v63, 2
    %v65 = vadd.f32 %v63, %v64
    %v66 = vrot.slane %v65, 1
    %v67 = vadd.f32 %v65, %v66
    %v68 = vrcp.pop 64.0
    %v69 = vmul.f32 %v67, %v68
    %v70 = vsub.f32 %v47, %v69
    %v71 = vsub.f32 %v48, %v69
    %v72 = vsub.f32 %v49, %v69
    %v73 = vsub.f32 %v50, %v69
    %v74 = vsub.f32 %v51, %v69
    %v75 = vsub.f32 %v52, %v69
    %v76 = vsub.f32 %v53, %v69
    %v77 = vsub.f32 %v54, %v69
    %v78 = vmul.f32 %v70, %v70
    %v79 = vmul.f32 %v71, %v71
    %v80 = vmul.f32 %v72, %v72
    %v81 = vmul.f32 %v73, %v73
    %v82 = vmul.f32 %v74, %v74
    %v83 = vmul.f32 %v75, %v75
    %v84 = vmul.f32 %v76, %v76
    %v85 = vmul.f32 %v77, %v77
    %v86 = vadd.f32 %v78, %v79
    %v87 = vadd.f32 %v86, %v80
    %v88 = vadd.f32 %v87, %v81
    %v89 = vadd.f32 %v88, %v82
    %v90 = vadd.f32 %v89, %v83
    %v91 = vadd.f32 %v90, %v84
    %v92 = vadd.f32 %v91, %v85
    %v93 = vrot.slane %v92, 4
    %v94 = vadd.f32 %v92, %v93
    %v95 = vrot.slane %v94, 2
    %v96 = vadd.f32 %v94, %v95
    %v97 = vrot.slane %v96, 1
    %v98 = vadd.f32 %v96, %v97
    %v99 = vmul.f32 %v98, %v68
    %v100 = vadd.f32 %v99, 1e-05
    %v101 = vrsqrt.pop %v100
    %v102 = vmul.f32 %v70, %v101
    %v103 = vmul.f32 %v71, %v101
    %v104 = vmul.f32 %v72, %v101
    %v105 = vmul.f32 %v73, %v101
    %v106 = vmul.f32 %v74, %v101
    %v107 = vmul.f32 %v75, %v101
    %v108 = vmul.f32 %v76, %v101
    %v109 = vmul.f32 %v77, %v101
    %110 = vxpose.xlu0.b32.start [1/16] %v102, 128
    %111 = vxpose.xlu0.b32.cont [2/16] %v103, 128
    %112 = vxpose.xlu0.b32.cont [3/16] %v104, 128
    %113 = vxpose.xlu0.b32.cont [4/16] %v105, 128
    %114 = vxpose.xlu0.b32.cont [5/16] %v106, 128
    %115 = vxpose.xlu0.b32.cont [6/16] %v107, 128
    %116 = vxpose.xlu0.b32.cont [7/16] %v108, 128
    %117 = vxpose.xlu0.b32.cont [8/16] %v109, 128
    %118 = vxpose.xlu0.b32.cont [9/16] 0.0, 128
    %119 = vxpose.xlu0.b32.cont [10/16] 0.0, 128
    %120 = vxpose.xlu0.b32.cont [11/16] 0.0, 128
    %121 = vxpose.xlu0.b32.cont [12/16] 0.0, 128
    %122 = vxpose.xlu0.b32.cont [13/16] 0.0, 128
    %123 = vxpose.xlu0.b32.cont [14/16] 0.0, 128
    %124 = vxpose.xlu0.b32.cont [15/16] 0.0, 128
    %125 = vxpose.xlu0.b32.end [16/16] 0.0, 128
    %v126 = vpop.trf.xlu0
    %v127 = vpop.trf.xlu0
    %v128 = vpop.trf.xlu0
    %v129 = vpop.trf.xlu0
    %v130 = vpop.trf.xlu0
    %v131 = vpop.trf.xlu0
    %v132 = vpop.trf.xlu0
    %v133 = vpop.trf.xlu0
    %v134 = vpop.trf.xlu0
    %v135 = vpop.trf.xlu0
    %v136 = vpop.trf.xlu0
    %v137 = vpop.trf.xlu0
    %v138 = vpop.trf.xlu0
    %v139 = vpop.trf.xlu0
    %v140 = vpop.trf.xlu0
    %v141 = vpop.trf.xlu0
    %vm142 = vcmask 523264
    %v144 = vsel %vm142, %v126, 0
    %v147 = vsel %vm142, %v127, 0
    %v150 = vsel %vm142, %v128, 0
    %v153 = vsel %vm142, %v129, 0
    %v156 = vsel %vm142, %v130, 0
    %v159 = vsel %vm142, %v131, 0
    %v162 = vsel %vm142, %v132, 0
    %v165 = vsel %vm142, %v133, 0
    %v168 = vsel %vm142, %v134, 0
    %v171 = vsel %vm142, %v135, 0
    %v174 = vsel %vm142, %v136, 0
    %v177 = vsel %vm142, %v137, 0
    %v180 = vsel %vm142, %v138, 0
    %v183 = vsel %vm142, %v139, 0
    %v186 = vsel %vm142, %v140, 0
    %v189 = vsel %vm142, %v141, 0
    %191 = vmatprep.subr.mxu0 0.0
    %192 = vmatpush1.msra.mxu0 %v102
    %193 = vmatprep.subr.mxu0 0.0
    %194 = vmatpush1.msra.mxu0 %v103
    %195 = vmatprep.subr.mxu0 0.0
    %196 = vmatpush1.msra.mxu0 %v104
    %197 = vmatprep.subr.mxu0 0.0
    %198 = vmatpush1.msra.mxu0 %v105
    %199 = vmatprep.subr.mxu0 0.0
    %200 = vmatpush1.msra.mxu0 %v106
    %201 = vmatprep.subr.mxu0 0.0
    %202 = vmatpush1.msra.mxu0 %v107
    %203 = vmatprep.subr.mxu0 0.0
    %204 = vmatpush1.msra.mxu0 %v108
    %205 = vmatprep.subr.mxu0 0.0
    %206 = vmatpush1.msra.mxu0 %v109
    %207 = vmatprep.subr.mxu0 0.0
    %208 = vmatpush1.msra.mxu0 0.0
    %209 = vmatprep.subr.mxu0 0.0
    %210 = vmatpush1.msra.mxu0 0.0
    %211 = vmatprep.subr.mxu0 0.0
    %212 = vmatpush1.msra.mxu0 0.0
    %213 = vmatprep.subr.mxu0 0.0
    %214 = vmatpush1.msra.mxu0 0.0
    %215 = vmatprep.subr.mxu0 0.0
    %216 = vmatpush1.msra.mxu0 0.0
    %217 = vmatprep.subr.mxu0 0.0
    %218 = vmatpush1.msra.mxu0 0.0
    %219 = vmatprep.subr.mxu0 0.0
    %220 = vmatpush1.msra.mxu0 0.0
    %221 = vmatprep.subr.mxu0 0.0
    %222 = vmatpush1.msra.mxu0 0.0
    %223 = vmatprep.subr.mxu0 0.0
    %224 = vmatpush1.msra.mxu0 0.0
    %225 = vmatprep.subr.mxu0 0.0
    %226 = vmatpush1.msra.mxu0 0.0
    %227 = vmatprep.subr.mxu0 0.0
    %228 = vmatpush1.msra.mxu0 0.0
    %229 = vmatprep.subr.mxu0 0.0
    %230 = vmatpush1.msra.mxu0 0.0
    %231 = vmatprep.subr.mxu0 0.0
    %232 = vmatpush1.msra.mxu0 0.0
    %233 = vmatprep.subr.mxu0 0.0
    %234 = vmatpush1.msra.mxu0 0.0
    %235 = vmatprep.subr.mxu0 0.0
    %236 = vmatpush1.msra.mxu0 0.0
    %237 = vmatprep.subr.mxu0 0.0
    %238 = vmatpush1.msra.mxu0 0.0
    %239 = vmatprep.subr.mxu0 0.0
    %240 = vmatpush1.msra.mxu0 0.0
    %241 = vmatprep.subr.mxu0 0.0
    %242 = vmatpush1.msra.mxu0 0.0
    %243 = vmatprep.subr.mxu0 0.0
    %244 = vmatpush1.msra.mxu0 0.0
    %245 = vmatprep.subr.mxu0 0.0
    %246 = vmatpush1.msra.mxu0 0.0
    %247 = vmatprep.subr.mxu0 0.0
    %248 = vmatpush1.msra.mxu0 0.0
    %249 = vmatprep.subr.mxu0 0.0
    %250 = vmatpush1.msra.mxu0 0.0
    %251 = vmatprep.subr.mxu0 0.0
    %252 = vmatpush1.msra.mxu0 0.0
    %253 = vmatprep.subr.mxu0 0.0
    %254 = vmatpush1.msra.mxu0 0.0
    %255 = vmatprep.mubr.f32.mxu0 0.0
    %256 = vmatmul.mubr.f32.gmra.mrb[0].mxu0 %v144
    %v257 = vpop.f32.mrb[0].mxu0
    %v258 = vadd.f32 0.0, %v257
    %v259 = vpop.f32.mrb[0].mxu0
    %260 = vmatprep.mubr.f32.mxu0 0.0
    %261 = vmatmul.mubr.f32.gmra.mrb[0].mxu0 %v147
    %v262 = vpop.f32.mrb[0].mxu0
    %v263 = vadd.f32 0.0, %v262
    %v264 = vpop.f32.mrb[0].mxu0
    %265 = vmatprep.mubr.f32.mxu0 0.0
    %266 = vmatmul.mubr.f32.gmra.mrb[0].mxu0 %v150
    %v267 = vpop.f32.mrb[0].mxu0
    %v268 = vadd.f32 0.0, %v267
    %v269 = vpop.f32.mrb[0].mxu0
    %270 = vmatprep.mubr.f32.mxu0 0.0
    %271 = vmatmul.mubr.f32.gmra.mrb[0].mxu0 %v153
    %v272 = vpop.f32.mrb[0].mxu0
    %v273 = vadd.f32 0.0, %v272
    %v274 = vpop.f32.mrb[0].mxu0
    %275 = vmatprep.mubr.f32.mxu0 0.0
    %276 = vmatmul.mubr.f32.gmra.mrb[0].mxu0 %v156
    %v277 = vpop.f32.mrb[0].mxu0
    %v278 = vadd.f32 0.0, %v277
    %v279 = vpop.f32.mrb[0].mxu0
    %280 = vmatprep.mubr.f32.mxu0 0.0
    %281 = vmatmul.mubr.f32.gmra.mrb[0].mxu0 %v159
    %v282 = vpop.f32.mrb[0].mxu0
    %v283 = vadd.f32 0.0, %v282
    %v284 = vpop.f32.mrb[0].mxu0
    %285 = vmatprep.mubr.f32.mxu0 0.0
    %286 = vmatmul.mubr.f32.gmra.mrb[0].mxu0 %v162
    %v287 = vpop.f32.mrb[0].mxu0
    %v288 = vadd.f32 0.0, %v287
    %v289 = vpop.f32.mrb[0].mxu0
    %290 = vmatprep.mubr.f32.mxu0 0.0
    %291 = vmatmul.mubr.f32.gmra.mrb[0].mxu0 %v165
    %v292 = vpop.f32.mrb[0].mxu0
    %v293 = vadd.f32 0.0, %v292
    %v294 = vpop.f32.mrb[0].mxu0
    %295 = vmatprep.mubr.f32.mxu0 0.0
    %296 = vmatmul.mubr.f32.gmra.mrb[0].mxu0 %v168
    %v297 = vpop.f32.mrb[0].mxu0
    %v298 = vadd.f32 0.0, %v297
    %v299 = vpop.f32.mrb[0].mxu0
    %300 = vmatprep.mubr.f32.mxu0 0.0
    %301 = vmatmul.mubr.f32.gmra.mrb[0].mxu0 %v171
    %v302 = vpop.f32.mrb[0].mxu0
    %v303 = vadd.f32 0.0, %v302
    %v304 = vpop.f32.mrb[0].mxu0
    %305 = vmatprep.mubr.f32.mxu0 0.0
    %306 = vmatmul.mubr.f32.gmra.mrb[0].mxu0 %v174
    %v307 = vpop.f32.mrb[0].mxu0
    %v308 = vadd.f32 0.0, %v307
    %v309 = vpop.f32.mrb[0].mxu0
    %310 = vmatprep.mubr.f32.mxu0 0.0
    %311 = vmatmul.mubr.f32.gmra.mrb[0].mxu0 %v177
    %v312 = vpop.f32.mrb[0].mxu0
    %v313 = vadd.f32 0.0, %v312
    %v314 = vpop.f32.mrb[0].mxu0
    %315 = vmatprep.mubr.f32.mxu0 0.0
    %316 = vmatmul.mubr.f32.gmra.mrb[0].mxu0 %v180
    %v317 = vpop.f32.mrb[0].mxu0
    %v318 = vadd.f32 0.0, %v317
    %v319 = vpop.f32.mrb[0].mxu0
    %320 = vmatprep.mubr.f32.mxu0 0.0
    %321 = vmatmul.mubr.f32.gmra.mrb[0].mxu0 %v183
    %v322 = vpop.f32.mrb[0].mxu0
    %v323 = vadd.f32 0.0, %v322
    %v324 = vpop.f32.mrb[0].mxu0
    %325 = vmatprep.mubr.f32.mxu0 0.0
    %326 = vmatmul.mubr.f32.gmra.mrb[0].mxu0 %v186
    %v327 = vpop.f32.mrb[0].mxu0
    %v328 = vadd.f32 0.0, %v327
    %v329 = vpop.f32.mrb[0].mxu0
    %330 = vmatprep.mubr.f32.mxu0 0.0
    %331 = vmatmul.mubr.f32.gmra.mrb[0].mxu0 %v189
    %v332 = vpop.f32.mrb[0].mxu0
    %v333 = vadd.f32 0.0, %v332
    %v334 = vpop.f32.mrb[0].mxu0
    %335 = vdwg.mxu0
    %v336 = vmul.f32 %v258, 0.015873017
    %v337 = vmul.f32 %v263, 0.015873017
    %v338 = vmul.f32 %v268, 0.015873017
    %v339 = vmul.f32 %v273, 0.015873017
    %v340 = vmul.f32 %v278, 0.015873017
    %v341 = vmul.f32 %v283, 0.015873017
    %v342 = vmul.f32 %v288, 0.015873017
    %v343 = vmul.f32 %v293, 0.015873017
    %v344 = vmul.f32 %v298, 0.015873017
    %v345 = vmul.f32 %v303, 0.015873017
    %v346 = vmul.f32 %v308, 0.015873017
    %v347 = vmul.f32 %v313, 0.015873017
    %v348 = vmul.f32 %v318, 0.015873017
    %v349 = vmul.f32 %v323, 0.015873017
    %v350 = vmul.f32 %v328, 0.015873017
    %v351 = vmul.f32 %v333, 0.015873017
    %v352 = vld [vmem:[#allocation7] sm:$0xff]
    %v353 = vld [vmem:[#allocation7 + $0x8] sm:$0xff]
    %v354 = vld [vmem:[#allocation7 + $0x10] sm:$0xff]
    %v355 = vld [vmem:[#allocation7 + $0x18] sm:$0xff]
    %v356 = vld [vmem:[#allocation7 + $0x20] sm:$0xff]
    %v357 = vld [vmem:[#allocation7 + $0x28] sm:$0xff]
    %v358 = vld [vmem:[#allocation7 + $0x30] sm:$0xff]
    %v359 = vld [vmem:[#allocation7 + $0x38] sm:$0xff]
    %v360 = vld [vmem:[#allocation7 + $0x40] sm:$0xff]
    %v361 = vld [vmem:[#allocation7 + $0x48] sm:$0xff]
    %v362 = vld [vmem:[#allocation7 + $0x50] sm:$0xff]
    %v363 = vld [vmem:[#allocation7 + $0x58] sm:$0xff]
    %v364 = vld [vmem:[#allocation7 + $0x60] sm:$0xff]
    %v365 = vld [vmem:[#allocation7 + $0x68] sm:$0xff]
    %v366 = vld [vmem:[#allocation7 + $0x70] sm:$0xff]
    %v367 = vld [vmem:[#allocation7 + $0x78] sm:$0xff]
    %v368 = vmul.f32 %v352, 0.9
    %v369 = vmul.f32 %v353, 0.9
    %v370 = vmul.f32 %v354, 0.9
    %v371 = vmul.f32 %v355, 0.9
    %v372 = vmul.f32 %v356, 0.9
    %v373 = vmul.f32 %v357, 0.9
    %v374 = vmul.f32 %v358, 0.9
    %v375 = vmul.f32 %v359, 0.9
    %v376 = vmul.f32 %v360, 0.9
    %v377 = vmul.f32 %v361, 0.9
    %v378 = vmul.f32 %v362, 0.9
    %v379 = vmul.f32 %v363, 0.9
    %v380 = vmul.f32 %v364, 0.9
    %v381 = vmul.f32 %v365, 0.9
    %v382 = vmul.f32 %v366, 0.9
    %v383 = vmul.f32 %v367, 0.9
    %v384 = vadd.f32 %v368, %v336
    %v385 = vadd.f32 %v369, %v337
    %v386 = vadd.f32 %v370, %v338
    %v387 = vadd.f32 %v371, %v339
    %v388 = vadd.f32 %v372, %v340
    %v389 = vadd.f32 %v373, %v341
    %v390 = vadd.f32 %v374, %v342
    %v391 = vadd.f32 %v375, %v343
    %v392 = vadd.f32 %v376, %v344
    %v393 = vadd.f32 %v377, %v345
    %v394 = vadd.f32 %v378, %v346
    %v395 = vadd.f32 %v379, %v347
    %v396 = vadd.f32 %v380, %v348
    %v397 = vadd.f32 %v381, %v349
    %v398 = vadd.f32 %v382, %v350
    %v399 = vadd.f32 %v383, %v351
    %400 = vst [vmem:[#allocation10] sm:$0xff] %v384
    %401 = vst [vmem:[#allocation10 + $0x8] sm:$0xff] %v385
    %402 = vst [vmem:[#allocation10 + $0x10] sm:$0xff] %v386
    %403 = vst [vmem:[#allocation10 + $0x18] sm:$0xff] %v387
    %404 = vst [vmem:[#allocation10 + $0x20] sm:$0xff] %v388
    %405 = vst [vmem:[#allocation10 + $0x28] sm:$0xff] %v389
    %406 = vst [vmem:[#allocation10 + $0x30] sm:$0xff] %v390
    %407 = vst [vmem:[#allocation10 + $0x38] sm:$0xff] %v391
    %408 = vst [vmem:[#allocation10 + $0x40] sm:$0xff] %v392
    %409 = vst [vmem:[#allocation10 + $0x48] sm:$0xff] %v393
    %410 = vst [vmem:[#allocation10 + $0x50] sm:$0xff] %v394
    %411 = vst [vmem:[#allocation10 + $0x58] sm:$0xff] %v395
    %412 = vst [vmem:[#allocation10 + $0x60] sm:$0xff] %v396
    %413 = vst [vmem:[#allocation10 + $0x68] sm:$0xff] %v397
    %414 = vst [vmem:[#allocation10 + $0x70] sm:$0xff] %v398
    %415 = vst [vmem:[#allocation10 + $0x78] sm:$0xff] %v399
    %s416 = sld [smem:[#allocation2]]
    %s417 = smul.f32 %s416, 0.9
    %s418 = sadd.f32 %s417, 1.0
    %v419 = vand.u32 2147483647, %v384
    %v420 = vand.u32 2147483647, %v385
    %v421 = vand.u32 2147483647, %v386
    %v422 = vand.u32 2147483647, %v387
    %v423 = vand.u32 2147483647, %v388
    %v424 = vand.u32 2147483647, %v389
    %v425 = vand.u32 2147483647, %v390
    %v426 = vand.u32 2147483647, %v391
    %v427 = vand.u32 2147483647, %v392
    %v428 = vand.u32 2147483647, %v393
    %v429 = vand.u32 2147483647, %v394
    %v430 = vand.u32 2147483647, %v395
    %v431 = vand.u32 2147483647, %v396
    %v432 = vand.u32 2147483647, %v397
    %v433 = vand.u32 2147483647, %v398
    %v434 = vand.u32 2147483647, %v399
    %v435 = vlaneseq
    %v436 = vshrl.u32 %v435, 7
    %v437 = vadd.s32 %v436, 8
    %v438 = vadd.s32 %v436, 16
    %v439 = vadd.s32 %v436, 24
    %v440 = vadd.s32 %v436, 32
    %v441 = vadd.s32 %v436, 40
    %v442 = vadd.s32 %v436, 48
    %v443 = vadd.s32 %v436, 56
    %v444 = vadd.s32 %v436, 64
    %v445 = vadd.s32 %v436, 72
    %v446 = vadd.s32 %v436, 80
    %v447 = vadd.s32 %v436, 88
    %v448 = vadd.s32 %v436, 96
    %v449 = vadd.s32 %v436, 104
    %v450 = vadd.s32 %v436, 112
    %v451 = vadd.s32 %v436, 120
    %v452 = vlaneseq
    %v453 = vand.u32 %v452, 127
    %vm454 = vcmp.eq.s32.totalorder %v436, %v453
    %vm455 = vcmp.eq.s32.totalorder %v437, %v453
    %vm456 = vcmp.eq.s32.totalorder %v438, %v453
    %vm457 = vcmp.eq.s32.totalorder %v439, %v453
    %vm458 = vcmp.eq.s32.totalorder %v440, %v453
    %vm459 = vcmp.eq.s32.totalorder %v441, %v453
    %vm460 = vcmp.eq.s32.totalorder %v442, %v453
    %vm461 = vcmp.eq.s32.totalorder %v443, %v453
    %vm462 = vcmp.eq.s32.totalorder %v444, %v453
    %vm463 = vcmp.eq.s32.totalorder %v445, %v453
    %vm464 = vcmp.eq.s32.totalorder %v446, %v453
    %vm465 = vcmp.eq.s32.totalorder %v447, %v453
    %vm466 = vcmp.eq.s32.totalorder %v448, %v453
    %vm467 = vcmp.eq.s32.totalorder %v449, %v453
    %vm468 = vcmp.eq.s32.totalorder %v450, %v453
    %vm469 = vcmp.eq.s32.totalorder %v451, %v453
    %v470 = vsel %vm454, 0.0, %v419
    %v471 = vsel %vm455, 0.0, %v420
    %v472 = vsel %vm456, 0.0, %v421
    %v473 = vsel %vm457, 0.0, %v422
    %v474 = vsel %vm458, 0.0, %v423
    %v475 = vsel %vm459, 0.0, %v424
    %v476 = vsel %vm460, 0.0, %v425
    %v477 = vsel %vm461, 0.0, %v426
    %v478 = vsel %vm462, 0.0, %v427
    %v479 = vsel %vm463, 0.0, %v428
    %v480 = vsel %vm464, 0.0, %v429
    %v481 = vsel %vm465, 0.0, %v430
    %v482 = vsel %vm466, 0.0, %v431
    %v483 = vsel %vm467, 0.0, %v432
    %v484 = vsel %vm468, 0.0, %v433
    %v485 = vsel %vm469, 0.0, %v434
    %v486 = vadd.f32 %v470, %v471
    %v487 = vadd.f32 %v486, %v472
    %v488 = vadd.f32 %v487, %v473
    %v489 = vadd.f32 %v488, %v474
    %v490 = vadd.f32 %v489, %v475
    %v491 = vadd.f32 %v490, %v476
    %v492 = vadd.f32 %v491, %v477
    %v493 = vadd.f32 %v492, %v478
    %v494 = vadd.f32 %v493, %v479
    %v495 = vadd.f32 %v494, %v480
    %v496 = vadd.f32 %v495, %v481
    %v497 = vadd.f32 %v496, %v482
    %v498 = vadd.f32 %v497, %v483
    %v499 = vadd.f32 %v498, %v484
    %v500 = vadd.f32 %v499, %v485
    %501 = vadd.xlane.f32.xlu0 %v500
    %v502 = vpop.xlane.xlu0 %501
    %v503 = vrot.slane %v502, 4
    %v504 = vadd.f32 %v502, %v503
    %v505 = vrot.slane %v504, 2
    %v506 = vadd.f32 %v504, %v505
    %v507 = vrot.slane %v506, 1
    %v508 = vadd.f32 %v506, %v507
    %s509 = vtos %v508
    %v510 = vstv %s418
    %v511 = vrcp.pop %v510
    %s512 = vtos %v511
    %s513 = sand.u32 2147483647, %s512
    %s514 = smul.f32 %s509, %s513
    %s515 = smul.f32 %s514, 6.151575e-05
    %s516 = scalar_lea.smem [#allocation9], 0
    %517 = sst [smem:[%s516]] %s515
    // Predicated region
    $region22: #{_sdl_forward.1} parent=1 // pred_check
      _
    $region23: #{_sdl_forward.1} parent=1 // pred_check_branch
      %519 = sbr.rel (0) target = $region25
    $region24: #{_sdl_forward.1} parent=1 // pred_region
      %s521 = ssub.s32 16, 16
      %522 = vsyncadd [#allocation6], %s521
      %525 = dma.smem_to_hbm [#allocation9], 16, %s3, [#allocation6]
    $region25: #{_sdl_forward.1} parent=1 // pred_fallthru
      _
    // Predicated region
    $region26: #{_sdl_forward.1} parent=1 // pred_check
      _
    $region27: #{_sdl_forward.1} parent=1 // pred_check_branch
      %527 = sbr.rel (0) target = $region29
    $region28: #{_sdl_forward.1} parent=1 // pred_region
      %s529 = ssub.s32 2048, 2048
      %530 = vsyncadd [#allocation5], %s529
      %s531 = sshll.u32 [#allocation10], 4
      %s532 = int_to_ptr.vmem [resolvable:$true] %s531
      %537 = dma.vmem_to_hbm [thread:$0]  %s532, 2048, %s4, [#allocation5], 128, 128, 8
    $region29: #{_sdl_forward.1} parent=1 // pred_fallthru
      _
    // Predicated region
    $region30: #{_sdl_forward.1} parent=1 // pred_check
      _
    $region31: #{_sdl_forward.1} parent=1 // pred_check_branch
      %539 = sbr.rel (0) target = $region33
    $region32: #{_sdl_forward.1} parent=1 // pred_region
      %540 = dma.done [#allocation6], 16
    $region33: #{_sdl_forward.1} parent=1 // pred_fallthru
      _
    // Predicated region
    $region34: #{_sdl_forward.1} parent=1 // pred_check
      _
    $region35: #{_sdl_forward.1} parent=1 // pred_check_branch
      %542 = sbr.rel (0) target = $region37
    $region36: #{_sdl_forward.1} parent=1 // pred_region
      %543 = dma.done [#allocation5], 2048
    $region37: #{_sdl_forward.1} parent=1 // pred_fallthru
      _
    %544 = sfence
    %545 = vsyncpa [#allocation4], 1
    %546 = vsyncpa [#allocation8], 1
    %547 = vsyncpa [#allocation5], 1
    %548 = vsyncpa [#allocation6], 1

</llo_original>
